<compile_context>
chip_gen: v7x
topology: tpu7x:2x2x1
jax: 0.10.0
libtpu: 0.0.40
codegen_flags: <defaults>
</compile_context>

<pallas_src>
import functools

import jax
import jax.numpy as jnp
from jax import lax
from jax.experimental import pallas as pl
from jax.experimental.pallas import tpu as pltpu


# dot_general dimension numbers (same convention as the Pallas TPU flash kernels)
_TN = (((0,), (0,)), ((), ()))   # contract dim 0 of both operands
_NT = (((1,), (1,)), ((), ()))   # contract dim 1 of both operands


def _self_attn_kernel(x_ref, xq_ref, wfh_ref, bfh_ref, wg_ref, bg_ref,
                      scale_ref, o_ref, *, channels):
    """One (batch, query-tile) grid step, working in (C, N) layout.

    x_ref   : (1, C, N)   full pixel range of this batch element (keys/values)
    xq_ref  : (1, C, TQ)  query-tile slice of the same batch element
    wfh_ref : (2C, C)     fused [Wf; Wh] 1x1-conv weights
    bfh_ref : (2C, 1)     fused [bf; bh]
    wg_ref  : (C, C), bg_ref: (C, 1)
    scale_ref: (1,) f32 in SMEM
    o_ref   : (1, C, TQ)
    """
    C = channels
    x = x_ref[0]        # (C, N)  f32, pixels on lanes
    x_q = xq_ref[0]     # (C, TQ) f32

    # f / h 1x1 convs fused into a single (2C, C) @ (C, N) matmul (no weight .T).
    fh = jnp.dot(wfh_ref[...], x, preferred_element_type=jnp.float32) + bfh_ref[...]
    f = fh[:C, :]       # (C, N)
    h = fh[C:, :]       # (C, N)

    # g only needs the query tile.
    g_q = (jnp.dot(wg_ref[...], x_q, preferred_element_type=jnp.float32)
           + bg_ref[...])                                            # (C, TQ)

    # scores: s[i, j] = sum_c g[c, i] * f[c, j]  -> (TQ, N)
    # Contract the channel axes directly; bf16 MXU inputs, f32 accumulation.
    s = lax.dot_general(g_q.astype(jnp.bfloat16), f.astype(jnp.bfloat16), _TN,
                        preferred_element_type=jnp.float32)          # (TQ, N)

    # Softmax over keys (last dim), f32; EUP reciprocal instead of a VALU divide.
    s = s - jnp.max(s, axis=-1, keepdims=True)
    p = jnp.exp(s)
    attn = p * pl.reciprocal(jnp.sum(p, axis=-1, keepdims=True), approx=True)

    # o[c, i] = sum_j h[c, j] * attn[i, j]  -> (C, TQ) (lane-dense output).
    o = lax.dot_general(h.astype(jnp.bfloat16), attn.astype(jnp.bfloat16), _NT,
                        preferred_element_type=jnp.float32)          # (C, TQ)

    scale = scale_ref[0]
    o_ref[0] = x_q + scale * o


def self_attention_pallas(x_nchw, wf, bf, wg, bg, wh, bh, scale, *, tq=128):
    """x_nchw: (B, C, H, W) float32.  Returns (B, C, H, W)."""
    B, C, H, W = x_nchw.shape
    N = H * W

    # NCHW flattens straight into the (B, C, N) kernel layout. No transposes.
    x_bcn = x_nchw.reshape(B, C, N)

    # Query-tile size: multiple of 128 dividing N, else one full-N tile
    # (block_shape then equals the full dim, satisfying the (8,128) rule).
    if N % tq != 0 or tq % 128 != 0:
        tq = N
    nq = N // tq

    w_fh = jnp.concatenate([wf, wh], axis=0)                      # (2C, C)
    b_fh = jnp.concatenate([bf, bh], axis=0).reshape(2 * C, 1)    # (2C, 1)
    bg2 = bg.reshape(C, 1)
    scale1 = scale.reshape(1).astype(jnp.float32)

    kernel = functools.partial(_self_attn_kernel, channels=C)

    out_bcn = pl.pallas_call(
        kernel,
        out_shape=jax.ShapeDtypeStruct((B, C, N), jnp.float32),
        grid_spec=pltpu.PrefetchScalarGridSpec(
            num_scalar_prefetch=0,
            grid=(B, nq),
            in_specs=[
                pl.BlockSpec((1, C, N), lambda b, q: (b, 0, 0)),     # x keys/values
                pl.BlockSpec((1, C, tq), lambda b, q: (b, 0, q)),    # x query tile
                pl.BlockSpec((2 * C, C), lambda b, q: (0, 0)),       # [Wf; Wh]
                pl.BlockSpec((2 * C, 1), lambda b, q: (0, 0)),       # [bf; bh]
                pl.BlockSpec((C, C), lambda b, q: (0, 0)),           # Wg
                pl.BlockSpec((C, 1), lambda b, q: (0, 0)),           # bg
                pl.BlockSpec(memory_space=pltpu.MemorySpace.SMEM),   # scale scalar
            ],
            out_specs=pl.BlockSpec((1, C, tq), lambda b, q: (b, 0, q)),
        ),
        compiler_params=pltpu.CompilerParams(
            dimension_semantics=("parallel", "parallel"),
            vmem_limit_bytes=32 * 1024 * 1024),
    )(x_bcn, x_bcn, w_fh, b_fh, wg, bg2, scale1)

    return out_bcn.reshape(B, C, H, W)


def self_attention_ref(x, wf, bf, wg, bg, wh, bh, scale):
    """Pure-JAX reference mirroring the PyTorch forward exactly (NCHW, f32)."""
    B, C, H, W = x.shape
    N = H * W

    def conv1x1(x, w, b):
        return jnp.einsum('bchw,oc->bohw', x, w) + b[None, :, None, None]

    f = conv1x1(x, wf, bf).reshape(B, C, N)
    g = conv1x1(x, wg, bg).reshape(B, C, N)
    h = conv1x1(x, wh, bh).reshape(B, C, N)
    s = jnp.einsum('bci,bcj->bij', g, f)          # (B, N, N)
    b_sm = jax.nn.softmax(s, axis=-1)
    o = jnp.einsum('bcj,bij->bci', h, b_sm)       # (B, C, N)
    o = o.reshape(B, C, H, W)
    return x + scale[0] * o


if __name__ == "__main__":
    B, C, H, W = 2, 4, 16, 16
    key = jax.random.PRNGKey(0)
    kx, kwf, kbf, kwg, kbg, kwh, kbh = jax.random.split(key, 7)

    x = jax.random.normal(kx, (B, C, H, W), dtype=jnp.float32)

    # Conv2d(C, C, kernel_size=1) params -> weight (C, C), bias (C,)
    wf = jax.random.normal(kwf, (C, C), dtype=jnp.float32) * 0.1
    bf = jax.random.normal(kbf, (C,), dtype=jnp.float32) * 0.1
    wg = jax.random.normal(kwg, (C, C), dtype=jnp.float32) * 0.1
    bg = jax.random.normal(kbg, (C,), dtype=jnp.float32) * 0.1
    wh = jax.random.normal(kwh, (C, C), dtype=jnp.float32) * 0.1
    bh = jax.random.normal(kbh, (C,), dtype=jnp.float32) * 0.1
    # nn.Parameter(torch.zeros(1)) in the module; use a nonzero deterministic
    # value so the attention path actually contributes to the output.
    scale = jnp.array([0.5], dtype=jnp.float32)

    out = self_attention_pallas(x, wf, bf, wg, bg, wh, bh, scale)
    out = jax.block_until_ready(out)

    ref = self_attention_ref(x, wf, bf, wg, bg, wh, bh, scale)
    assert out.shape == (B, C, H, W)
    # bf16 MXU inputs + approx reciprocal in the kernel -> slightly looser tol.
    assert jnp.allclose(out, ref, atol=2e-2, rtol=2e-2), "mismatch vs reference"

    print("KERNEL_OK")
</pallas_src>

<mosaic_0001>
module attributes {stable_mosaic.version = 11 : i64} {
  func.func @_self_attn_kernel(%arg0: i32, %arg1: i32, %arg2: memref<1x4x256xf32, #tpu.memory_space<vmem>>, %arg3: memref<1x4x128xf32, #tpu.memory_space<vmem>>, %arg4: memref<8x4xf32, #tpu.memory_space<vmem>>, %arg5: memref<8x1xf32, #tpu.memory_space<vmem>>, %arg6: memref<4x4xf32, #tpu.memory_space<vmem>>, %arg7: memref<4x1xf32, #tpu.memory_space<vmem>>, %arg8: memref<1xf32, #tpu.memory_space<smem>>, %arg9: memref<1x4x128xf32, #tpu.memory_space<vmem>>) attributes {dimension_semantics = [#tpu.dimension_semantics<parallel>, #tpu.dimension_semantics<parallel>], iteration_bounds = array<i64: 2, 2>, scalar_prefetch = 0 : i64, scratch_operands = 0 : i64, tpu.core_type = #tpu.core_type<tc>, window_params = [{transform_indices = @transform_0, window_bounds = array<i64: 1, 4, 256>}, {transform_indices = @transform_1, window_bounds = array<i64: 1, 4, 128>}, {pipeline_mode = #tpu.pipeline_mode<synchronous>, transform_indices = @transform_2, window_bounds = array<i64: 8, 4>}, {pipeline_mode = #tpu.pipeline_mode<synchronous>, transform_indices = @transform_3, window_bounds = array<i64: 8, 1>}, {pipeline_mode = #tpu.pipeline_mode<synchronous>, transform_indices = @transform_4, window_bounds = array<i64: 4, 4>}, {pipeline_mode = #tpu.pipeline_mode<synchronous>, transform_indices = @transform_5, window_bounds = array<i64: 4, 1>}, {transform_indices = @transform_6, window_bounds = array<i64: 1>}, {transform_indices = @transform_7, window_bounds = array<i64: 1, 4, 128>}]} {
    %c0 = arith.constant 0 : index
    %c0_0 = arith.constant 0 : index
    %c0_1 = arith.constant 0 : index
    %0 = vector.load %arg2[%c0, %c0_0, %c0_1] : memref<1x4x256xf32, #tpu.memory_space<vmem>>, vector<1x4x256xf32>
    %1 = vector.shape_cast %0 : vector<1x4x256xf32> to vector<4x256xf32>
    %c0_2 = arith.constant 0 : index
    %c0_3 = arith.constant 0 : index
    %c0_4 = arith.constant 0 : index
    %2 = vector.load %arg3[%c0_2, %c0_3, %c0_4] : memref<1x4x128xf32, #tpu.memory_space<vmem>>, vector<1x4x128xf32>
    %3 = vector.shape_cast %2 : vector<1x4x128xf32> to vector<4x128xf32>
    %c0_5 = arith.constant 0 : index
    %c0_6 = arith.constant 0 : index
    %4 = vector.load %arg4[%c0_5, %c0_6] : memref<8x4xf32, #tpu.memory_space<vmem>>, vector<8x4xf32>
    %cst = arith.constant dense<0.000000e+00> : vector<8x256xf32>
    %5 = tpu.matmul %4, %1, %cst {dimension_numbers = #tpu.dot_dimension_numbers<[1], [0], [0], [1], [0, 0, 1, 1], [], []>} : vector<8x4xf32>, vector<4x256xf32>, vector<8x256xf32> -> vector<8x256xf32>
    %c0_7 = arith.constant 0 : index
    %c0_8 = arith.constant 0 : index
    %6 = vector.load %arg5[%c0_7, %c0_8] : memref<8x1xf32, #tpu.memory_space<vmem>>, vector<8x1xf32>
    %7 = vector.broadcast %6 : vector<8x1xf32> to vector<8x256xf32>
    %8 = arith.addf %5, %7 : vector<8x256xf32>
    %9 = vector.extract_strided_slice %8 {offsets = [0, 0], sizes = [4, 256], strides = [1, 1]} : vector<8x256xf32> to vector<4x256xf32>
    %10 = vector.extract_strided_slice %8 {offsets = [4, 0], sizes = [4, 256], strides = [1, 1]} : vector<8x256xf32> to vector<4x256xf32>
    %c0_9 = arith.constant 0 : index
    %c0_10 = arith.constant 0 : index
    %11 = vector.load %arg6[%c0_9, %c0_10] : memref<4x4xf32, #tpu.memory_space<vmem>>, vector<4x4xf32>
    %cst_11 = arith.constant dense<0.000000e+00> : vector<4x128xf32>
    %12 = tpu.matmul %11, %3, %cst_11 {dimension_numbers = #tpu.dot_dimension_numbers<[1], [0], [0], [1], [0, 0, 1, 1], [], []>} : vector<4x4xf32>, vector<4x128xf32>, vector<4x128xf32> -> vector<4x128xf32>
    %c0_12 = arith.constant 0 : index
    %c0_13 = arith.constant 0 : index
    %13 = vector.load %arg7[%c0_12, %c0_13] : memref<4x1xf32, #tpu.memory_space<vmem>>, vector<4x1xf32>
    %14 = vector.broadcast %13 : vector<4x1xf32> to vector<4x128xf32>
    %15 = arith.addf %12, %14 : vector<4x128xf32>
    %16 = arith.truncf %15 : vector<4x128xf32> to vector<4x128xbf16>
    %17 = arith.truncf %9 : vector<4x256xf32> to vector<4x256xbf16>
    %cst_14 = arith.constant dense<0.000000e+00> : vector<128x256xf32>
    %18 = tpu.matmul %16, %17, %cst_14 {dimension_numbers = #tpu.dot_dimension_numbers<[0], [0], [1], [1], [0, 1, 1, 1], [], []>} : vector<4x128xbf16>, vector<4x256xbf16>, vector<128x256xf32> -> vector<128x256xf32>
    %cst_15 = arith.constant dense<0xFF800000> : vector<128xf32>
    %19 = vector.multi_reduction <maximumf>, %18, %cst_15 [1] : vector<128x256xf32> to vector<128xf32>
    %20 = vector.shape_cast %19 : vector<128xf32> to vector<128x1xf32>
    %21 = vector.broadcast %20 : vector<128x1xf32> to vector<128x256xf32>
    %22 = arith.subf %18, %21 : vector<128x256xf32>
    %23 = math.exp %22 : vector<128x256xf32>
    %cst_16 = arith.constant dense<0.000000e+00> : vector<128xf32>
    %24 = vector.multi_reduction <add>, %23, %cst_16 [1] : vector<128x256xf32> to vector<128xf32>
    %25 = vector.shape_cast %24 : vector<128xf32> to vector<128x1xf32>
    %26 = tpu.reciprocal %25 {approx = true} : vector<128x1xf32> -> vector<128x1xf32>
    %27 = vector.broadcast %26 : vector<128x1xf32> to vector<128x256xf32>
    %28 = arith.mulf %23, %27 : vector<128x256xf32>
    %29 = arith.truncf %10 : vector<4x256xf32> to vector<4x256xbf16>
    %30 = arith.truncf %28 : vector<128x256xf32> to vector<128x256xbf16>
    %cst_17 = arith.constant dense<0.000000e+00> : vector<4x128xf32>
    %31 = tpu.matmul %29, %30, %cst_17 {dimension_numbers = #tpu.dot_dimension_numbers<[1], [1], [0], [0], [0, 0, 1, 0], [], []>} : vector<4x256xbf16>, vector<128x256xbf16>, vector<4x128xf32> -> vector<4x128xf32>
    %c0_18 = arith.constant 0 : index
    %32 = memref.load %arg8[%c0_18] : memref<1xf32, #tpu.memory_space<smem>>
    %33 = vector.broadcast %32 : f32 to vector<4x128xf32>
    %34 = arith.mulf %33, %31 : vector<4x128xf32>
    %35 = arith.addf %3, %34 : vector<4x128xf32>
    %c0_19 = arith.constant 0 : index
    %c0_20 = arith.constant 0 : index
    %c0_21 = arith.constant 0 : index
    %36 = vector.load %arg9[%c0_19, %c0_20, %c0_21] : memref<1x4x128xf32, #tpu.memory_space<vmem>>, vector<1x4x128xf32>
    %37 = vector.shape_cast %36 : vector<1x4x128xf32> to vector<4x128xf32>
    %38 = vector.shape_cast %35 : vector<4x128xf32> to vector<1x4x128xf32>
    tpu.vector_store %arg9[%c0_19, %c0_20, %c0_21], %38 {strides = array<i32>} : memref<1x4x128xf32, #tpu.memory_space<vmem>>, vector<1x4x128xf32>,
    return
  }
  func.func @transform_0(%arg0: i32, %arg1: i32) -> (i32, i32, i32) {
    %c0_i32 = arith.constant 0 : i32
    %c0_i32_0 = arith.constant 0 : i32
    %c0_i32_1 = arith.constant 0 : i32
    return %arg0, %c0_i32, %c0_i32_0 : i32, i32, i32
  }
  func.func @transform_1(%arg0: i32, %arg1: i32) -> (i32, i32, i32) {
    %c0_i32 = arith.constant 0 : i32
    %c0_i32_0 = arith.constant 0 : i32
    return %arg0, %c0_i32, %arg1 : i32, i32, i32
  }
  func.func @transform_2(%arg0: i32, %arg1: i32) -> (i32, i32) {
    %c0_i32 = arith.constant 0 : i32
    %c0_i32_0 = arith.constant 0 : i32
    %c0_i32_1 = arith.constant 0 : i32
    return %c0_i32, %c0_i32_0 : i32, i32
  }
  func.func @transform_3(%arg0: i32, %arg1: i32) -> (i32, i32) {
    %c0_i32 = arith.constant 0 : i32
    %c0_i32_0 = arith.constant 0 : i32
    %c0_i32_1 = arith.constant 0 : i32
    return %c0_i32, %c0_i32_0 : i32, i32
  }
  func.func @transform_4(%arg0: i32, %arg1: i32) -> (i32, i32) {
    %c0_i32 = arith.constant 0 : i32
    %c0_i32_0 = arith.constant 0 : i32
    %c0_i32_1 = arith.constant 0 : i32
    return %c0_i32, %c0_i32_0 : i32, i32
  }
  func.func @transform_5(%arg0: i32, %arg1: i32) -> (i32, i32) {
    %c0_i32 = arith.constant 0 : i32
    %c0_i32_0 = arith.constant 0 : i32
    %c0_i32_1 = arith.constant 0 : i32
    return %c0_i32, %c0_i32_0 : i32, i32
  }
  func.func @transform_6(%arg0: i32, %arg1: i32) -> i32 {
    %c0_i32 = arith.constant 0 : i32
    %c0_i32_0 = arith.constant 0 : i32
    return %c0_i32 : i32
  }
  func.func @transform_7(%arg0: i32, %arg1: i32) -> (i32, i32, i32) {
    %c0_i32 = arith.constant 0 : i32
    %c0_i32_0 = arith.constant 0 : i32
    return %arg0, %c0_i32, %arg1 : i32, i32, i32
  }
}

</mosaic_0001>

<llo_original>
// kernel: tpu_custom_call.1
$region0: #{tpu_custom_call.1}
  #allocation0 [shape = 'u32[]', space=smem, size = 0x4, offset = 0x4, fixed_abs, tag = 'smem constant byte address 0x4 - core index']
  #allocation1 [shape = 'u32[144,128]{1,0:T(1,128)}', space=vmem, size = 0x12000, scoped, tag = 'internal scratch']
  #allocation2 [shape = 'f32[1]{0:T(128)S(6)}', space=smem, size = 0x200, scoped, tag = 'scoped memory for tpu_custom_call.1']
  %s0 = inlined_call_operand.vmem [shape: f32[2,4,256], index: 0, kind: input, shape index: {}]
  %s1 = inlined_call_operand.vmem [shape: f32[2,4,256], index: 1, kind: input, shape index: {}]
  %s2 = inlined_call_operand.vmem [shape: f32[8,4], index: 2, kind: input, shape index: {}]
  %s3 = inlined_call_operand.vmem [shape: f32[8,1], index: 3, kind: input, shape index: {}]
  %s4 = inlined_call_operand.vmem [shape: f32[4,4], index: 4, kind: input, shape index: {}]
  %s5 = inlined_call_operand.vmem [shape: f32[4,1], index: 5, kind: input, shape index: {}]
  %s6 = inlined_call_operand.<no memory space> [shape: f32[1], index: 6, kind: input, shape index: {}]
  %s7 = inlined_call_operand.hbm [shape: f32[2,4,256], index: 7, kind: output, shape index: {}]
  %s8 = sld [smem:[#allocation0]]
  $region61: #{tpu_custom_call.1} parent=0
    _
  %s10 = ssub.s32 1, %s8
  %s11 = scalar_select 0, %s10, %s8
  %12 = sst [smem:[#allocation2]] %s6
  $region1: #{tpu_custom_call.1} parent=0
    #allocation3 [shape = 'u8[4096]{0}', space=vmem, size = 0x1000, scoped, tag = 'output window, operand 0']
    #allocation4 [shape = 's32[2]{0}', space=sflag, size = 0x8, scoped, tag = 'scoped memory for tpu_custom_call.1']
    %13 = vsyncpa [#allocation4], 0
    %s14 = scalar_lea.sflag [#allocation4], 1
    %15 = vsyncpa %s14, 0
    loop: start=0, step=1, limit=6
    $region2: #{tpu_custom_call.1} parent=1 // loop_pre_header
      _
    $region3: #{tpu_custom_call.1} parent=1 // loop_header
      %s17 = sphi 0, %s21
      %p18 = scmp.ge.s32.totalorder %s17, 6
      %s24 = sphi 0, %s36
      %s25 = sphi 0, %s32
      %s26 = sphi 0, %s24
      %s27 = sphi 0, %s25
      %s28 = sphi 0, %s26
      %s29 = sphi 0, %s27
      %s39 = sphi 0, %s41
      %s42 = sphi 0, %s39
      %s43 = sphi 0, %s42
      %s59 = sphi 0, %s43
      %s67 = sphi 0, %s69
      %s70 = sphi 0, %s67
      %s71 = sphi 0, %s70
      %s87 = sphi 0, %s71
      %s91 = sphi 0, %s91
      %s93 = sphi 0, %s91
      %s94 = sphi 0, %s93
      %s108 = sphi 0, %s94
      %s112 = sphi 0, %s112
      %s114 = sphi 0, %s112
      %s115 = sphi 0, %s114
      %s129 = sphi 0, %s115
      %s133 = sphi 0, %s133
      %s135 = sphi 0, %s133
      %s136 = sphi 0, %s135
      %s150 = sphi 0, %s136
      %s154 = sphi 0, %s154
      %s156 = sphi 0, %s154
      %s157 = sphi 0, %s156
      %s171 = sphi 0, %s157
      %s175 = sphi 0, %s175
      %s177 = sphi 0, %s175
      %s178 = sphi 0, %s177
      %s192 = sphi 0, %s178
      %s200 = sphi 0, %s202
      %s203 = sphi 0, %s200
      %s204 = sphi 0, %s203
      %s220 = sphi 0, %s204
    $region4: #{tpu_custom_call.1} parent=1 // loop_header_branch
      %20 = sbr.rel (%p18) target = $region8
    $region5: #{tpu_custom_call.1} parent=1 // loop_body
      %s22 = ssub.s32 %s17, 1
      %s23 = ssub.s32 %s17, 2
      %s30 = sadd.s32 1, %s25
      %p31 = scmp.ge.s32.totalorder %s30, 2
      %s32 = scalar_select %p31, 0, %s30
      %s33 = sadd.s32 1, %s24
      %s34 = scalar_select %p31, %s33, %s24
      %p35 = scmp.ge.s32.totalorder %s34, 2
      %s36 = scalar_select %p35, 0, %s34
      %s37 = ssub.s32 %s24, %s36
      %p38 = scmp.eq.s32.totalorder %s37, 0
      %s40 = sadd.s32 %s39, 1
      %s41 = scalar_select %p38, %s39, %s40
      %p44 = pneg %p38
      %p45 = scmp.eq.s32.totalorder %s17, 3
      %p46 = por %p44, %p45
      %p47 = scmp.ne.s32.totalorder %s39, %s42
      %p48 = scmp.eq.s32.totalorder %s17, 0
      %p49 = por %p47, %p48
      %p50 = scmp.ne.s32.totalorder %s39, %s42
      %p51 = scmp.eq.s32.totalorder %s22, 3
      %p52 = por %p50, %p51
      %p53 = scmp.ne.s32.totalorder %s42, %s43
      %p54 = scmp.eq.s32.totalorder %s22, 0
      %p55 = por %p53, %p54
      %p56 = scmp.ne.s32.totalorder %s42, %s43
      %p57 = scmp.eq.s32.totalorder %s23, 3
      %p58 = por %p56, %p57
      %p60 = scmp.ne.s32.totalorder %s43, %s59
      %p61 = scmp.eq.s32.totalorder %s23, 0
      %p62 = por %p60, %p61
      %s63 = ssub.s32 %s24, %s36
      %s64 = ssub.s32 %s25, %s32
      %s65 = sor.u32 %s63, %s64
      %p66 = scmp.eq.s32.totalorder %s65, 0
      %s68 = sadd.s32 %s67, 1
      %s69 = scalar_select %p66, %s67, %s68
      %p72 = pneg %p66
      %p73 = scmp.eq.s32.totalorder %s17, 3
      %p74 = por %p72, %p73
      %p75 = scmp.ne.s32.totalorder %s67, %s70
      %p76 = scmp.eq.s32.totalorder %s17, 0
      %p77 = por %p75, %p76
      %p78 = scmp.ne.s32.totalorder %s67, %s70
      %p79 = scmp.eq.s32.totalorder %s22, 3
      %p80 = por %p78, %p79
      %p81 = scmp.ne.s32.totalorder %s70, %s71
      %p82 = scmp.eq.s32.totalorder %s22, 0
      %p83 = por %p81, %p82
      %p84 = scmp.ne.s32.totalorder %s70, %s71
      %p85 = scmp.eq.s32.totalorder %s23, 3
      %p86 = por %p84, %p85
      %p88 = scmp.ne.s32.totalorder %s71, %s87
      %p89 = scmp.eq.s32.totalorder %s23, 0
      %p90 = por %p88, %p89
      %s92 = sadd.s32 %s91, 1
      %p95 = scmp.eq.s32.totalorder %s17, 3
      %p96 = scmp.ne.s32.totalorder %s91, %s93
      %p97 = scmp.eq.s32.totalorder %s17, 0
      %p98 = por %p96, %p97
      %p99 = scmp.ne.s32.totalorder %s91, %s93
      %p100 = scmp.eq.s32.totalorder %s22, 3
      %p101 = por %p99, %p100
      %p102 = scmp.ne.s32.totalorder %s93, %s94
      %p103 = scmp.eq.s32.totalorder %s22, 0
      %p104 = por %p102, %p103
      %p105 = scmp.ne.s32.totalorder %s93, %s94
      %p106 = scmp.eq.s32.totalorder %s23, 3
      %p107 = por %p105, %p106
      %p109 = scmp.ne.s32.totalorder %s94, %s108
      %p110 = scmp.eq.s32.totalorder %s23, 0
      %p111 = por %p109, %p110
      %s113 = sadd.s32 %s112, 1
      %p116 = scmp.eq.s32.totalorder %s17, 3
      %p117 = scmp.ne.s32.totalorder %s112, %s114
      %p118 = scmp.eq.s32.totalorder %s17, 0
      %p119 = por %p117, %p118
      %p120 = scmp.ne.s32.totalorder %s112, %s114
      %p121 = scmp.eq.s32.totalorder %s22, 3
      %p122 = por %p120, %p121
      %p123 = scmp.ne.s32.totalorder %s114, %s115
      %p124 = scmp.eq.s32.totalorder %s22, 0
      %p125 = por %p123, %p124
      %p126 = scmp.ne.s32.totalorder %s114, %s115
      %p127 = scmp.eq.s32.totalorder %s23, 3
      %p128 = por %p126, %p127
      %p130 = scmp.ne.s32.totalorder %s115, %s129
      %p131 = scmp.eq.s32.totalorder %s23, 0
      %p132 = por %p130, %p131
      %s134 = sadd.s32 %s133, 1
      %p137 = scmp.eq.s32.totalorder %s17, 3
      %p138 = scmp.ne.s32.totalorder %s133, %s135
      %p139 = scmp.eq.s32.totalorder %s17, 0
      %p140 = por %p138, %p139
      %p141 = scmp.ne.s32.totalorder %s133, %s135
      %p142 = scmp.eq.s32.totalorder %s22, 3
      %p143 = por %p141, %p142
      %p144 = scmp.ne.s32.totalorder %s135, %s136
      %p145 = scmp.eq.s32.totalorder %s22, 0
      %p146 = por %p144, %p145
      %p147 = scmp.ne.s32.totalorder %s135, %s136
      %p148 = scmp.eq.s32.totalorder %s23, 3
      %p149 = por %p147, %p148
      %p151 = scmp.ne.s32.totalorder %s136, %s150
      %p152 = scmp.eq.s32.totalorder %s23, 0
      %p153 = por %p151, %p152
      %s155 = sadd.s32 %s154, 1
      %p158 = scmp.eq.s32.totalorder %s17, 3
      %p159 = scmp.ne.s32.totalorder %s154, %s156
      %p160 = scmp.eq.s32.totalorder %s17, 0
      %p161 = por %p159, %p160
      %p162 = scmp.ne.s32.totalorder %s154, %s156
      %p163 = scmp.eq.s32.totalorder %s22, 3
      %p164 = por %p162, %p163
      %p165 = scmp.ne.s32.totalorder %s156, %s157
      %p166 = scmp.eq.s32.totalorder %s22, 0
      %p167 = por %p165, %p166
      %p168 = scmp.ne.s32.totalorder %s156, %s157
      %p169 = scmp.eq.s32.totalorder %s23, 3
      %p170 = por %p168, %p169
      %p172 = scmp.ne.s32.totalorder %s157, %s171
      %p173 = scmp.eq.s32.totalorder %s23, 0
      %p174 = por %p172, %p173
      %s176 = sadd.s32 %s175, 1
      %p179 = scmp.eq.s32.totalorder %s17, 3
      %p180 = scmp.ne.s32.totalorder %s175, %s177
      %p181 = scmp.eq.s32.totalorder %s17, 0
      %p182 = por %p180, %p181
      %p183 = scmp.ne.s32.totalorder %s175, %s177
      %p184 = scmp.eq.s32.totalorder %s22, 3
      %p185 = por %p183, %p184
      %p186 = scmp.ne.s32.totalorder %s177, %s178
      %p187 = scmp.eq.s32.totalorder %s22, 0
      %p188 = por %p186, %p187
      %p189 = scmp.ne.s32.totalorder %s177, %s178
      %p190 = scmp.eq.s32.totalorder %s23, 3
      %p191 = por %p189, %p190
      %p193 = scmp.ne.s32.totalorder %s178, %s192
      %p194 = scmp.eq.s32.totalorder %s23, 0
      %p195 = por %p193, %p194
      %s196 = ssub.s32 %s24, %s36
      %s197 = ssub.s32 %s25, %s32
      %s198 = sor.u32 %s196, %s197
      %p199 = scmp.eq.s32.totalorder %s198, 0
      %s201 = sadd.s32 %s200, 1
      %s202 = scalar_select %p199, %s200, %s201
      %p205 = pneg %p199
      %p206 = scmp.eq.s32.totalorder %s17, 3
      %p207 = por %p205, %p206
      %p208 = scmp.ne.s32.totalorder %s200, %s203
      %p209 = scmp.eq.s32.totalorder %s17, 0
      %p210 = por %p208, %p209
      %p211 = scmp.ne.s32.totalorder %s200, %s203
      %p212 = scmp.eq.s32.totalorder %s22, 3
      %p213 = por %p211, %p212
      %p214 = scmp.ne.s32.totalorder %s203, %s204
      %p215 = scmp.eq.s32.totalorder %s22, 0
      %p216 = por %p214, %p215
      %p217 = scmp.ne.s32.totalorder %s203, %s204
      %p218 = scmp.eq.s32.totalorder %s23, 3
      %p219 = por %p217, %p218
      %p221 = scmp.ne.s32.totalorder %s204, %s220
      %p222 = scmp.eq.s32.totalorder %s23, 0
      %p223 = por %p221, %p222
      %p224 = scmp.le.s32.totalorder 1, %s17
      %p225 = scmp.lt.s32.totalorder %s17, 5
      %p226 = pnand %p224, %p225
      %p227 = pneg %p226
      // Predicated region
      $region9: #{tpu_custom_call.1} parent=5 // pred_check
        _
      $region10: #{tpu_custom_call.1} parent=5 // pred_check_branch
        %229 = sbr.rel (%p226) target = $region12
      $region11: #{tpu_custom_call.1} parent=5 // pred_region
        %s230 = ssub.s32 %s17, 1
        // Predicated region
        $region13: #{tpu_custom_call.1} parent=11 // pred_check
          %p231 = pneg %p104
        $region14: #{tpu_custom_call.1} parent=11 // pred_check_branch
          %233 = sbr.rel (%p231) target = $region16
        $region15: #{tpu_custom_call.1} parent=11 // pred_region
          _
        $region16: #{tpu_custom_call.1} parent=11 // pred_fallthru
          _
        // Predicated region
        $region17: #{tpu_custom_call.1} parent=11 // pred_check
          %p234 = pneg %p125
        $region18: #{tpu_custom_call.1} parent=11 // pred_check_branch
          %236 = sbr.rel (%p234) target = $region20
        $region19: #{tpu_custom_call.1} parent=11 // pred_region
          _
        $region20: #{tpu_custom_call.1} parent=11 // pred_fallthru
          _
        // Predicated region
        $region21: #{tpu_custom_call.1} parent=11 // pred_check
          %p237 = pneg %p146
        $region22: #{tpu_custom_call.1} parent=11 // pred_check_branch
          %239 = sbr.rel (%p237) target = $region24
        $region23: #{tpu_custom_call.1} parent=11 // pred_region
          _
        $region24: #{tpu_custom_call.1} parent=11 // pred_fallthru
          _
        // Predicated region
        $region25: #{tpu_custom_call.1} parent=11 // pred_check
          %p240 = pneg %p167
        $region26: #{tpu_custom_call.1} parent=11 // pred_check_branch
          %242 = sbr.rel (%p240) target = $region28
        $region27: #{tpu_custom_call.1} parent=11 // pred_region
          _
        $region28: #{tpu_custom_call.1} parent=11 // pred_fallthru
          _
        // Predicated region
        $region29: #{tpu_custom_call.1} parent=11 // pred_check
          %p243 = pneg %p188
        $region30: #{tpu_custom_call.1} parent=11 // pred_check_branch
          %245 = sbr.rel (%p243) target = $region32
        $region31: #{tpu_custom_call.1} parent=11 // pred_region
          _
        $region32: #{tpu_custom_call.1} parent=11 // pred_fallthru
          _
      $region12: #{tpu_custom_call.1} parent=5 // pred_fallthru
        _
      %p246 = scmp.lt.s32.totalorder %s17, 4
      // Predicated region
      $region33: #{tpu_custom_call.1} parent=5 // pred_check
        %p247 = pneg %p246
      $region34: #{tpu_custom_call.1} parent=5 // pred_check_branch
        %249 = sbr.rel (%p247) target = $region36
      $region35: #{tpu_custom_call.1} parent=5 // pred_region
        // Predicated region
        $region37: #{tpu_custom_call.1} parent=35 // pred_check
          %p250 = pneg %p49
        $region38: #{tpu_custom_call.1} parent=35 // pred_check_branch
          %252 = sbr.rel (%p250) target = $region40
        $region39: #{tpu_custom_call.1} parent=35 // pred_region
          %p253 = scmp.lt.s32.totalorder %s24, 1
          %s254 = scalar_select %p253, %s24, 1
          %s255 = smul.addr %s254, 2
          %s256 = smul.addr %s255, 4
          %s257 = scalar_lea.vmem %s0, %s256
        $region40: #{tpu_custom_call.1} parent=35 // pred_fallthru
          _
        // Predicated region
        $region41: #{tpu_custom_call.1} parent=35 // pred_check
          %p258 = pneg %p77
        $region42: #{tpu_custom_call.1} parent=35 // pred_check_branch
          %260 = sbr.rel (%p258) target = $region44
        $region43: #{tpu_custom_call.1} parent=35 // pred_region
          %p261 = scmp.lt.s32.totalorder %s24, 1
          %s262 = scalar_select %p261, %s24, 1
          %p263 = scmp.lt.s32.totalorder %s25, 1
          %s264 = scalar_select %p263, %s25, 1
          %s265 = smul.addr %s262, 2
          %s266 = sadd.s32 %s264, %s265
          %s267 = smul.addr %s266, 4
          %s268 = scalar_lea.vmem %s1, %s267
        $region44: #{tpu_custom_call.1} parent=35 // pred_fallthru
          _
      $region36: #{tpu_custom_call.1} parent=5 // pred_fallthru
        _
      %p269 = scmp.le.s32.totalorder 1, %s17
      %p270 = scmp.lt.s32.totalorder %s17, 5
      %p271 = pnand %p269, %p270
      %p272 = pneg %p271
      // Predicated region
      $region45: #{tpu_custom_call.1} parent=5 // pred_check
        _
      $region46: #{tpu_custom_call.1} parent=5 // pred_check_branch
        %274 = sbr.rel (%p271) target = $region48
      $region47: #{tpu_custom_call.1} parent=5 // pred_region
        %s275 = ssub.s32 %s17, 1
        %p276 = scmp.lt.s32.totalorder %s26, 1
        %s277 = scalar_select %p276, %s26, 1
        %s278 = smul.addr %s277, 2
        %s279 = smul.addr %s278, 4
        %s280 = scalar_lea.vmem %s0, %s279
        %p281 = pneg %p55
        %p282 = pneg %p52
        %p283 = scmp.lt.s32.totalorder %s26, 1
        %s284 = scalar_select %p283, %s26, 1
        %p285 = scmp.lt.s32.totalorder %s27, 1
        %s286 = scalar_select %p285, %s27, 1
        %s287 = smul.addr %s284, 2
        %s288 = sadd.s32 %s286, %s287
        %s289 = smul.addr %s288, 4
        %s290 = scalar_lea.vmem %s1, %s289
        %p291 = pneg %p83
        %p292 = pneg %p80
        %p293 = pneg %p104
        %p294 = pneg %p101
        %p295 = pneg %p125
        %p296 = pneg %p122
        %p297 = pneg %p146
        %p298 = pneg %p143
        %p299 = pneg %p167
        %p300 = pneg %p164
        %p301 = pneg %p188
        %p302 = pneg %p185
        %p303 = pneg %p216
        %p304 = pneg %p213
        %s305 = sand.u32 %s203, 1
        %s306 = scalar_lea.sflag [#allocation4], %s305
        %s307 = sand.u32 %s203, 1
        %s308 = smul.addr %s307, 4
        %s309 = scalar_lea.vmem [#allocation3], %s308
        %p310 = scmp.lt.s32.totalorder %s26, 1
        %s311 = scalar_select %p310, %s26, 1
        %s312 = smul.addr %s311, 2
        %s313 = smul.addr %s312, 4
        %s314 = scalar_lea.vmem %s0, %s313
        %p315 = scmp.lt.s32.totalorder %s26, 1
        %s316 = scalar_select %p315, %s26, 1
        %p317 = scmp.lt.s32.totalorder %s27, 1
        %s318 = scalar_select %p317, %s27, 1
        %s319 = smul.addr %s316, 2
        %s320 = sadd.s32 %s318, %s319
        %s321 = smul.addr %s320, 4
        %s322 = scalar_lea.vmem %s1, %s321
        %v324 = vld [vmem:[%s314] sm:$0xff]
        %v325 = vld [vmem:[%s322] sm:$0xf]
        %v326 = vld [vmem:[%s2] sm:$0xff]
        %v327 = vld [vmem:[%s3] sm:$0xff]
        %329 = vset.pattern.permute.xlu0 0
        %330 = vperm.xlu0 %329, %v327
        %v331 = vpop.permute.xlu0 %330
        %v334 = vcombine.high %v324, %v324
        %vm335 = vcmask 31744
        %v337 = vsel %vm335, %v326, 0
        %vm339 = vcmask 1043456
        %v340 = vsel %vm339, %v324, 0
        %v342 = vsel %vm339, %v334, 0
        %344 = vmatprep.subr.mxu0 %v342
        %345 = vmatpush1.msra.mxu0 %v340
        %346 = vmatprep.subr.mxu0 0.0
        %347 = vmatpush1.msra.mxu0 0.0
        %348 = vmatprep.subr.mxu0 0.0
        %349 = vmatpush1.msra.mxu0 0.0
        %350 = vmatprep.subr.mxu0 0.0
        %351 = vmatpush1.msra.mxu0 0.0
        %352 = vmatprep.subr.mxu0 0.0
        %353 = vmatpush1.msra.mxu0 0.0
        %354 = vmatprep.subr.mxu0 0.0
        %355 = vmatpush1.msra.mxu0 0.0
        %356 = vmatprep.subr.mxu0 0.0
        %357 = vmatpush1.msra.mxu0 0.0
        %358 = vmatprep.subr.mxu0 0.0
        %359 = vmatpush1.msra.mxu0 0.0
        %360 = vmatprep.subr.mxu0 0.0
        %361 = vmatpush1.msra.mxu0 0.0
        %362 = vmatprep.subr.mxu0 0.0
        %363 = vmatpush1.msra.mxu0 0.0
        %364 = vmatprep.subr.mxu0 0.0
        %365 = vmatpush1.msra.mxu0 0.0
        %366 = vmatprep.subr.mxu0 0.0
        %367 = vmatpush1.msra.mxu0 0.0
        %368 = vmatprep.subr.mxu0 0.0
        %369 = vmatpush1.msra.mxu0 0.0
        %370 = vmatprep.subr.mxu0 0.0
        %371 = vmatpush1.msra.mxu0 0.0
        %372 = vmatprep.subr.mxu0 0.0
        %373 = vmatpush1.msra.mxu0 0.0
        %374 = vmatprep.subr.mxu0 0.0
        %375 = vmatpush1.msra.mxu0 0.0
        %376 = vmatprep.subr.mxu0 0.0
        %377 = vmatpush1.msra.mxu0 0.0
        %378 = vmatprep.subr.mxu0 0.0
        %379 = vmatpush1.msra.mxu0 0.0
        %380 = vmatprep.subr.mxu0 0.0
        %381 = vmatpush1.msra.mxu0 0.0
        %382 = vmatprep.subr.mxu0 0.0
        %383 = vmatpush1.msra.mxu0 0.0
        %384 = vmatprep.subr.mxu0 0.0
        %385 = vmatpush1.msra.mxu0 0.0
        %386 = vmatprep.subr.mxu0 0.0
        %387 = vmatpush1.msra.mxu0 0.0
        %388 = vmatprep.subr.mxu0 0.0
        %389 = vmatpush1.msra.mxu0 0.0
        %390 = vmatprep.subr.mxu0 0.0
        %391 = vmatpush1.msra.mxu0 0.0
        %392 = vmatprep.subr.mxu0 0.0
        %393 = vmatpush1.msra.mxu0 0.0
        %394 = vmatprep.subr.mxu0 0.0
        %395 = vmatpush1.msra.mxu0 0.0
        %396 = vmatprep.subr.mxu0 0.0
        %397 = vmatpush1.msra.mxu0 0.0
        %398 = vmatprep.subr.mxu0 0.0
        %399 = vmatpush1.msra.mxu0 0.0
        %400 = vmatprep.subr.mxu0 0.0
        %401 = vmatpush1.msra.mxu0 0.0
        %402 = vmatprep.subr.mxu0 0.0
        %403 = vmatpush1.msra.mxu0 0.0
        %404 = vmatprep.subr.mxu0 0.0
        %405 = vmatpush1.msra.mxu0 0.0
        %406 = vmatprep.subr.mxu0 0.0
        %407 = vmatpush1.msra.mxu0 0.0
        %408 = vmatprep.mubr.f32.mxu0 0.0
        %409 = vmatmul.mubr.f32.gmra.mrb[0].mxu0 %v337
        %v410 = vpop.f32.mrb[0].mxu0
        %v411 = vadd.f32 %v331, %v410
        %v412 = vpop.f32.mrb[0].mxu0
        %v413 = vadd.f32 %v331, %v412
        %414 = vdwg.mxu0
        %v415 = vld [vmem:[%s4] sm:$0xf]
        %v416 = vld [vmem:[%s5] sm:$0xf]
        %418 = vset.pattern.permute.xlu0 0
        %419 = vperm.xlu0 %418, %v416
        %v420 = vpop.permute.xlu0 %419
        %v423 = vsel %vm335, %v415, 0
        %v426 = vsel %vm339, %v325, 0
        %428 = vmatprep.subr.mxu0 0.0
        %429 = vmatpush1.msra.mxu0 %v426
        %430 = vmatprep.subr.mxu0 0.0
        %431 = vmatpush1.msra.mxu0 0.0
        %432 = vmatprep.subr.mxu0 0.0
        %433 = vmatpush1.msra.mxu0 0.0
        %434 = vmatprep.subr.mxu0 0.0
        %435 = vmatpush1.msra.mxu0 0.0
        %436 = vmatprep.subr.mxu0 0.0
        %437 = vmatpush1.msra.mxu0 0.0
        %438 = vmatprep.subr.mxu0 0.0
        %439 = vmatpush1.msra.mxu0 0.0
        %440 = vmatprep.subr.mxu0 0.0
        %441 = vmatpush1.msra.mxu0 0.0
        %442 = vmatprep.subr.mxu0 0.0
        %443 = vmatpush1.msra.mxu0 0.0
        %444 = vmatprep.subr.mxu0 0.0
        %445 = vmatpush1.msra.mxu0 0.0
        %446 = vmatprep.subr.mxu0 0.0
        %447 = vmatpush1.msra.mxu0 0.0
        %448 = vmatprep.subr.mxu0 0.0
        %449 = vmatpush1.msra.mxu0 0.0
        %450 = vmatprep.subr.mxu0 0.0
        %451 = vmatpush1.msra.mxu0 0.0
        %452 = vmatprep.subr.mxu0 0.0
        %453 = vmatpush1.msra.mxu0 0.0
        %454 = vmatprep.subr.mxu0 0.0
        %455 = vmatpush1.msra.mxu0 0.0
        %456 = vmatprep.subr.mxu0 0.0
        %457 = vmatpush1.msra.mxu0 0.0
        %458 = vmatprep.subr.mxu0 0.0
        %459 = vmatpush1.msra.mxu0 0.0
        %460 = vmatprep.subr.mxu0 0.0
        %461 = vmatpush1.msra.mxu0 0.0
        %462 = vmatprep.subr.mxu0 0.0
        %463 = vmatpush1.msra.mxu0 0.0
        %464 = vmatprep.subr.mxu0 0.0
        %465 = vmatpush1.msra.mxu0 0.0
        %466 = vmatprep.subr.mxu0 0.0
        %467 = vmatpush1.msra.mxu0 0.0
        %468 = vmatprep.subr.mxu0 0.0
        %469 = vmatpush1.msra.mxu0 0.0
        %470 = vmatprep.subr.mxu0 0.0
        %471 = vmatpush1.msra.mxu0 0.0
        %472 = vmatprep.subr.mxu0 0.0
        %473 = vmatpush1.msra.mxu0 0.0
        %474 = vmatprep.subr.mxu0 0.0
        %475 = vmatpush1.msra.mxu0 0.0
        %476 = vmatprep.subr.mxu0 0.0
        %477 = vmatpush1.msra.mxu0 0.0
        %478 = vmatprep.subr.mxu0 0.0
        %479 = vmatpush1.msra.mxu0 0.0
        %480 = vmatprep.subr.mxu0 0.0
        %481 = vmatpush1.msra.mxu0 0.0
        %482 = vmatprep.subr.mxu0 0.0
        %483 = vmatpush1.msra.mxu0 0.0
        %484 = vmatprep.subr.mxu0 0.0
        %485 = vmatpush1.msra.mxu0 0.0
        %486 = vmatprep.subr.mxu0 0.0
        %487 = vmatpush1.msra.mxu0 0.0
        %488 = vmatprep.subr.mxu0 0.0
        %489 = vmatpush1.msra.mxu0 0.0
        %490 = vmatprep.subr.mxu0 0.0
        %491 = vmatpush1.msra.mxu0 0.0
        %492 = vmatprep.mubr.f32.mxu0 0.0
        %493 = vmatmul.mubr.f32.gmra.mrb[0].mxu0 %v423
        %v494 = vpop.f32.mrb[0].mxu0
        %v495 = vadd.f32 %v420, %v494
        %v496 = vpop.f32.mrb[0].mxu0
        %497 = vdwg.mxu0
        %v498 = vpack.c.bf16 %v495, %v495
        %v499 = vpack.c.bf16 %v411, %v411
        %v500 = vpack.c.bf16 %v413, %v413
        %501 = vxpose.xlu0.c.b16.start [1/8] %v498, 128
        %502 = vxpose.xlu0.c.b16.cont [2/8] 0, 128
        %503 = vxpose.xlu0.c.b16.cont [3/8] 0, 128
        %504 = vxpose.xlu0.c.b16.cont [4/8] 0, 128
        %505 = vxpose.xlu0.c.b16.cont [5/8] 0, 128
        %506 = vxpose.xlu0.c.b16.cont [6/8] 0, 128
        %507 = vxpose.xlu0.c.b16.cont [7/8] 0, 128
        %508 = vxpose.xlu0.c.b16.end [8/8] 0, 128
        %v509 = vpop.trf.xlu0
        %v510 = vpop.trf.xlu0
        %v511 = vpop.trf.xlu0
        %v512 = vpop.trf.xlu0
        %v513 = vpop.trf.xlu0
        %v514 = vpop.trf.xlu0
        %v515 = vpop.trf.xlu0
        %v516 = vpop.trf.xlu0
        %v518 = vsel %vm335, %v509, 0
        %v521 = vsel %vm335, %v510, 0
        %v524 = vsel %vm335, %v511, 0
        %v527 = vsel %vm335, %v512, 0
        %v530 = vsel %vm335, %v513, 0
        %v533 = vsel %vm335, %v514, 0
        %v536 = vsel %vm335, %v515, 0
        %v539 = vsel %vm335, %v516, 0
        %vm541 = vcmask 1041408
        %v543 = vsel %vm541, %v499, 0
        %v546 = vsel %vm541, %v500, 0
        %548 = vmatprep.subr.bf16.mxu0 %v546
        %549 = vmatpush1.bf16.msra.mxu0 %v543
        %550 = vmatprep.subr.bf16.mxu0 0
        %551 = vmatpush1.bf16.msra.mxu0 0
        %552 = vmatprep.subr.bf16.mxu0 0
        %553 = vmatpush1.bf16.msra.mxu0 0
        %554 = vmatprep.subr.bf16.mxu0 0
        %555 = vmatpush1.bf16.msra.mxu0 0
        %556 = vmatprep.subr.bf16.mxu0 0
        %557 = vmatpush1.bf16.msra.mxu0 0
        %558 = vmatprep.subr.bf16.mxu0 0
        %559 = vmatpush1.bf16.msra.mxu0 0
        %560 = vmatprep.subr.bf16.mxu0 0
        %561 = vmatpush1.bf16.msra.mxu0 0
        %562 = vmatprep.subr.bf16.mxu0 0
        %563 = vmatpush1.bf16.msra.mxu0 0
        %564 = vmatprep.subr.bf16.mxu0 0
        %565 = vmatpush1.bf16.msra.mxu0 0
        %566 = vmatprep.subr.bf16.mxu0 0
        %567 = vmatpush1.bf16.msra.mxu0 0
        %568 = vmatprep.subr.bf16.mxu0 0
        %569 = vmatpush1.bf16.msra.mxu0 0
        %570 = vmatprep.subr.bf16.mxu0 0
        %571 = vmatpush1.bf16.msra.mxu0 0
        %572 = vmatprep.subr.bf16.mxu0 0
        %573 = vmatpush1.bf16.msra.mxu0 0
        %574 = vmatprep.subr.bf16.mxu0 0
        %575 = vmatpush1.bf16.msra.mxu0 0
        %576 = vmatprep.subr.bf16.mxu0 0
        %577 = vmatpush1.bf16.msra.mxu0 0
        %578 = vmatprep.subr.bf16.mxu0 0
        %579 = vmatpush1.bf16.msra.mxu0 0
        %580 = vmatprep.mubr.bf16.mxu0 0
        %581 = vmatmul.mubr.bf16.gmra.mrb[0].mxu0 %v518
        %v582 = vpop.f32.mrb[0].mxu0
        %v583 = vadd.f32 0.0, %v582
        %v584 = vpop.f32.mrb[0].mxu0
        %v585 = vadd.f32 0.0, %v584
        %v586 = vpop.f32.mrb[0].mxu0
        %v587 = vadd.f32 0.0, %v586
        %v588 = vpop.f32.mrb[0].mxu0
        %v589 = vadd.f32 0.0, %v588
        %590 = vmatprep.mubr.bf16.mxu0 0
        %591 = vmatmul.mubr.bf16.gmra.mrb[0].mxu0 %v521
        %v592 = vpop.f32.mrb[0].mxu0
        %v593 = vadd.f32 0.0, %v592
        %v594 = vpop.f32.mrb[0].mxu0
        %v595 = vadd.f32 0.0, %v594
        %v596 = vpop.f32.mrb[0].mxu0
        %v597 = vadd.f32 0.0, %v596
        %v598 = vpop.f32.mrb[0].mxu0
        %v599 = vadd.f32 0.0, %v598
        %600 = vmatprep.mubr.bf16.mxu0 0
        %601 = vmatmul.mubr.bf16.gmra.mrb[0].mxu0 %v524
        %v602 = vpop.f32.mrb[0].mxu0
        %v603 = vadd.f32 0.0, %v602
        %v604 = vpop.f32.mrb[0].mxu0
        %v605 = vadd.f32 0.0, %v604
        %v606 = vpop.f32.mrb[0].mxu0
        %v607 = vadd.f32 0.0, %v606
        %v608 = vpop.f32.mrb[0].mxu0
        %v609 = vadd.f32 0.0, %v608
        %610 = vmatprep.mubr.bf16.mxu0 0
        %611 = vmatmul.mubr.bf16.gmra.mrb[0].mxu0 %v527
        %v612 = vpop.f32.mrb[0].mxu0
        %v613 = vadd.f32 0.0, %v612
        %v614 = vpop.f32.mrb[0].mxu0
        %v615 = vadd.f32 0.0, %v614
        %v616 = vpop.f32.mrb[0].mxu0
        %v617 = vadd.f32 0.0, %v616
        %v618 = vpop.f32.mrb[0].mxu0
        %v619 = vadd.f32 0.0, %v618
        %620 = vmatprep.mubr.bf16.mxu0 0
        %621 = vmatmul.mubr.bf16.gmra.mrb[0].mxu0 %v530
        %v622 = vpop.f32.mrb[0].mxu0
        %v623 = vadd.f32 0.0, %v622
        %v624 = vpop.f32.mrb[0].mxu0
        %v625 = vadd.f32 0.0, %v624
        %v626 = vpop.f32.mrb[0].mxu0
        %v627 = vadd.f32 0.0, %v626
        %v628 = vpop.f32.mrb[0].mxu0
        %v629 = vadd.f32 0.0, %v628
        %630 = vmatprep.mubr.bf16.mxu0 0
        %631 = vmatmul.mubr.bf16.gmra.mrb[0].mxu0 %v533
        %v632 = vpop.f32.mrb[0].mxu0
        %v633 = vadd.f32 0.0, %v632
        %v634 = vpop.f32.mrb[0].mxu0
        %v635 = vadd.f32 0.0, %v634
        %v636 = vpop.f32.mrb[0].mxu0
        %v637 = vadd.f32 0.0, %v636
        %v638 = vpop.f32.mrb[0].mxu0
        %v639 = vadd.f32 0.0, %v638
        %640 = vmatprep.mubr.bf16.mxu0 0
        %641 = vmatmul.mubr.bf16.gmra.mrb[0].mxu0 %v536
        %v642 = vpop.f32.mrb[0].mxu0
        %v643 = vadd.f32 0.0, %v642
        %v644 = vpop.f32.mrb[0].mxu0
        %v645 = vadd.f32 0.0, %v644
        %v646 = vpop.f32.mrb[0].mxu0
        %v647 = vadd.f32 0.0, %v646
        %v648 = vpop.f32.mrb[0].mxu0
        %v649 = vadd.f32 0.0, %v648
        %650 = vmatprep.mubr.bf16.mxu0 0
        %651 = vmatmul.mubr.bf16.gmra.mrb[0].mxu0 %v539
        %v652 = vpop.f32.mrb[0].mxu0
        %v653 = vadd.f32 0.0, %v652
        %v654 = vpop.f32.mrb[0].mxu0
        %v655 = vadd.f32 0.0, %v654
        %v656 = vpop.f32.mrb[0].mxu0
        %v657 = vadd.f32 0.0, %v656
        %v658 = vpop.f32.mrb[0].mxu0
        %v659 = vadd.f32 0.0, %v658
        %660 = vdwg.mxu0
        %v661 = vmax.f32 %v583, %v585
        %662 = vmax.xlane.f32.xlu0 %v661
        %v663 = vpop.xlane.xlu0 %662
        %v664 = vmax.f32 %v587, %v589
        %665 = vmax.xlane.f32.xlu0 %v664
        %v666 = vpop.xlane.xlu0 %665
        %v667 = vmax.f32 %v593, %v595
        %668 = vmax.xlane.f32.xlu0 %v667
        %v669 = vpop.xlane.xlu0 %668
        %v670 = vmax.f32 %v597, %v599
        %671 = vmax.xlane.f32.xlu0 %v670
        %v672 = vpop.xlane.xlu0 %671
        %v673 = vmax.f32 %v603, %v605
        %674 = vmax.xlane.f32.xlu0 %v673
        %v675 = vpop.xlane.xlu0 %674
        %v676 = vmax.f32 %v607, %v609
        %677 = vmax.xlane.f32.xlu0 %v676
        %v678 = vpop.xlane.xlu0 %677
        %v679 = vmax.f32 %v613, %v615
        %680 = vmax.xlane.f32.xlu0 %v679
        %v681 = vpop.xlane.xlu0 %680
        %v682 = vmax.f32 %v617, %v619
        %683 = vmax.xlane.f32.xlu0 %v682
        %v684 = vpop.xlane.xlu0 %683
        %v685 = vmax.f32 %v623, %v625
        %686 = vmax.xlane.f32.xlu0 %v685
        %v687 = vpop.xlane.xlu0 %686
        %v688 = vmax.f32 %v627, %v629
        %689 = vmax.xlane.f32.xlu0 %v688
        %v690 = vpop.xlane.xlu0 %689
        %v691 = vmax.f32 %v633, %v635
        %692 = vmax.xlane.f32.xlu0 %v691
        %v693 = vpop.xlane.xlu0 %692
        %v694 = vmax.f32 %v637, %v639
        %695 = vmax.xlane.f32.xlu0 %v694
        %v696 = vpop.xlane.xlu0 %695
        %v697 = vmax.f32 %v643, %v645
        %698 = vmax.xlane.f32.xlu0 %v697
        %v699 = vpop.xlane.xlu0 %698
        %v700 = vmax.f32 %v647, %v649
        %701 = vmax.xlane.f32.xlu0 %v700
        %v702 = vpop.xlane.xlu0 %701
        %v703 = vmax.f32 %v653, %v655
        %704 = vmax.xlane.f32.xlu0 %v703
        %v705 = vpop.xlane.xlu0 %704
        %v706 = vmax.f32 %v657, %v659
        %707 = vmax.xlane.f32.xlu0 %v706
        %v708 = vpop.xlane.xlu0 %707
        %v709 = vsub.f32 %v583, %v663
        %v710 = vsub.f32 %v585, %v663
        %v711 = vsub.f32 %v587, %v666
        %v712 = vsub.f32 %v589, %v666
        %v713 = vsub.f32 %v593, %v669
        %v714 = vsub.f32 %v595, %v669
        %v715 = vsub.f32 %v597, %v672
        %v716 = vsub.f32 %v599, %v672
        %v717 = vsub.f32 %v603, %v675
        %v718 = vsub.f32 %v605, %v675
        %v719 = vsub.f32 %v607, %v678
        %v720 = vsub.f32 %v609, %v678
        %v721 = vsub.f32 %v613, %v681
        %v722 = vsub.f32 %v615, %v681
        %v723 = vsub.f32 %v617, %v684
        %v724 = vsub.f32 %v619, %v684
        %v725 = vsub.f32 %v623, %v687
        %v726 = vsub.f32 %v625, %v687
        %v727 = vsub.f32 %v627, %v690
        %v728 = vsub.f32 %v629, %v690
        %v729 = vsub.f32 %v633, %v693
        %v730 = vsub.f32 %v635, %v693
        %v731 = vsub.f32 %v637, %v696
        %v732 = vsub.f32 %v639, %v696
        %v733 = vsub.f32 %v643, %v699
        %v734 = vsub.f32 %v645, %v699
        %v735 = vsub.f32 %v647, %v702
        %v736 = vsub.f32 %v649, %v702
        %v737 = vsub.f32 %v653, %v705
        %v738 = vsub.f32 %v655, %v705
        %v739 = vsub.f32 %v657, %v708
        %v740 = vsub.f32 %v659, %v708
        %v741 = vmul.f32 %v709, 1.442695
        %v742 = vpow.pop %v741
        %v743 = vmul.f32 %v710, 1.442695
        %v744 = vpow.pop %v743
        %v745 = vmul.f32 %v711, 1.442695
        %v746 = vpow.pop %v745
        %v747 = vmul.f32 %v712, 1.442695
        %v748 = vpow.pop %v747
        %v749 = vmul.f32 %v713, 1.442695
        %v750 = vpow.pop %v749
        %v751 = vmul.f32 %v714, 1.442695
        %v752 = vpow.pop %v751
        %v753 = vmul.f32 %v715, 1.442695
        %v754 = vpow.pop %v753
        %v755 = vmul.f32 %v716, 1.442695
        %v756 = vpow.pop %v755
        %v757 = vmul.f32 %v717, 1.442695
        %v758 = vpow.pop %v757
        %v759 = vmul.f32 %v718, 1.442695
        %v760 = vpow.pop %v759
        %v761 = vmul.f32 %v719, 1.442695
        %v762 = vpow.pop %v761
        %v763 = vmul.f32 %v720, 1.442695
        %v764 = vpow.pop %v763
        %v765 = vmul.f32 %v721, 1.442695
        %v766 = vpow.pop %v765
        %v767 = vmul.f32 %v722, 1.442695
        %v768 = vpow.pop %v767
        %v769 = vmul.f32 %v723, 1.442695
        %v770 = vpow.pop %v769
        %v771 = vmul.f32 %v724, 1.442695
        %v772 = vpow.pop %v771
        %v773 = vmul.f32 %v725, 1.442695
        %v774 = vpow.pop %v773
        %v775 = vmul.f32 %v726, 1.442695
        %v776 = vpow.pop %v775
        %v777 = vmul.f32 %v727, 1.442695
        %v778 = vpow.pop %v777
        %v779 = vmul.f32 %v728, 1.442695
        %v780 = vpow.pop %v779
        %v781 = vmul.f32 %v729, 1.442695
        %v782 = vpow.pop %v781
        %v783 = vmul.f32 %v730, 1.442695
        %v784 = vpow.pop %v783
        %v785 = vmul.f32 %v731, 1.442695
        %v786 = vpow.pop %v785
        %v787 = vmul.f32 %v732, 1.442695
        %v788 = vpow.pop %v787
        %v789 = vmul.f32 %v733, 1.442695
        %v790 = vpow.pop %v789
        %v791 = vmul.f32 %v734, 1.442695
        %v792 = vpow.pop %v791
        %v793 = vmul.f32 %v735, 1.442695
        %v794 = vpow.pop %v793
        %v795 = vmul.f32 %v736, 1.442695
        %v796 = vpow.pop %v795
        %v797 = vmul.f32 %v737, 1.442695
        %v798 = vpow.pop %v797
        %v799 = vmul.f32 %v738, 1.442695
        %v800 = vpow.pop %v799
        %v801 = vmul.f32 %v739, 1.442695
        %v802 = vpow.pop %v801
        %v803 = vmul.f32 %v740, 1.442695
        %v804 = vpow.pop %v803
        %v805 = vadd.f32 %v742, %v744
        %806 = vadd.xlane.f32.xlu0 %v805
        %v807 = vpop.xlane.xlu0 %806
        %v808 = vadd.f32 %v746, %v748
        %809 = vadd.xlane.f32.xlu0 %v808
        %v810 = vpop.xlane.xlu0 %809
        %v811 = vadd.f32 %v750, %v752
        %812 = vadd.xlane.f32.xlu0 %v811
        %v813 = vpop.xlane.xlu0 %812
        %v814 = vadd.f32 %v754, %v756
        %815 = vadd.xlane.f32.xlu0 %v814
        %v816 = vpop.xlane.xlu0 %815
        %v817 = vadd.f32 %v758, %v760
        %818 = vadd.xlane.f32.xlu0 %v817
        %v819 = vpop.xlane.xlu0 %818
        %v820 = vadd.f32 %v762, %v764
        %821 = vadd.xlane.f32.xlu0 %v820
        %v822 = vpop.xlane.xlu0 %821
        %v823 = vadd.f32 %v766, %v768
        %824 = vadd.xlane.f32.xlu0 %v823
        %v825 = vpop.xlane.xlu0 %824
        %v826 = vadd.f32 %v770, %v772
        %827 = vadd.xlane.f32.xlu0 %v826
        %v828 = vpop.xlane.xlu0 %827
        %v829 = vadd.f32 %v774, %v776
        %830 = vadd.xlane.f32.xlu0 %v829
        %v831 = vpop.xlane.xlu0 %830
        %v832 = vadd.f32 %v778, %v780
        %833 = vadd.xlane.f32.xlu0 %v832
        %v834 = vpop.xlane.xlu0 %833
        %v835 = vadd.f32 %v782, %v784
        %836 = vadd.xlane.f32.xlu0 %v835
        %v837 = vpop.xlane.xlu0 %836
        %v838 = vadd.f32 %v786, %v788
        %839 = vadd.xlane.f32.xlu0 %v838
        %v840 = vpop.xlane.xlu0 %839
        %v841 = vadd.f32 %v790, %v792
        %842 = vadd.xlane.f32.xlu0 %v841
        %v843 = vpop.xlane.xlu0 %842
        %v844 = vadd.f32 %v794, %v796
        %845 = vadd.xlane.f32.xlu0 %v844
        %v846 = vpop.xlane.xlu0 %845
        %v847 = vadd.f32 %v798, %v800
        %848 = vadd.xlane.f32.xlu0 %v847
        %v849 = vpop.xlane.xlu0 %848
        %v850 = vadd.f32 %v802, %v804
        %851 = vadd.xlane.f32.xlu0 %v850
        %v852 = vpop.xlane.xlu0 %851
        %v853 = vrcp.pop %v807
        %v854 = vrcp.pop %v810
        %v855 = vrcp.pop %v813
        %v856 = vrcp.pop %v816
        %v857 = vrcp.pop %v819
        %v858 = vrcp.pop %v822
        %v859 = vrcp.pop %v825
        %v860 = vrcp.pop %v828
        %v861 = vrcp.pop %v831
        %v862 = vrcp.pop %v834
        %v863 = vrcp.pop %v837
        %v864 = vrcp.pop %v840
        %v865 = vrcp.pop %v843
        %v866 = vrcp.pop %v846
        %v867 = vrcp.pop %v849
        %v868 = vrcp.pop %v852
        %v869 = vmul.f32 %v742, %v853
        %v870 = vmul.f32 %v744, %v853
        %v871 = vmul.f32 %v746, %v854
        %v872 = vmul.f32 %v748, %v854
        %v873 = vmul.f32 %v750, %v855
        %v874 = vmul.f32 %v752, %v855
        %v875 = vmul.f32 %v754, %v856
        %v876 = vmul.f32 %v756, %v856
        %v877 = vmul.f32 %v758, %v857
        %v878 = vmul.f32 %v760, %v857
        %v879 = vmul.f32 %v762, %v858
        %v880 = vmul.f32 %v764, %v858
        %v881 = vmul.f32 %v766, %v859
        %v882 = vmul.f32 %v768, %v859
        %v883 = vmul.f32 %v770, %v860
        %v884 = vmul.f32 %v772, %v860
        %v885 = vmul.f32 %v774, %v861
        %v886 = vmul.f32 %v776, %v861
        %v887 = vmul.f32 %v778, %v862
        %v888 = vmul.f32 %v780, %v862
        %v889 = vmul.f32 %v782, %v863
        %v890 = vmul.f32 %v784, %v863
        %v891 = vmul.f32 %v786, %v864
        %v892 = vmul.f32 %v788, %v864
        %v893 = vmul.f32 %v790, %v865
        %v894 = vmul.f32 %v792, %v865
        %v895 = vmul.f32 %v794, %v866
        %v896 = vmul.f32 %v796, %v866
        %v897 = vmul.f32 %v798, %v867
        %v898 = vmul.f32 %v800, %v867
        %v899 = vmul.f32 %v802, %v868
        %v900 = vmul.f32 %v804, %v868
        %v901 = vpack.c.bf16 %v871, %v869
        %v902 = vpack.c.bf16 %v872, %v870
        %v903 = vpack.c.bf16 %v875, %v873
        %v904 = vpack.c.bf16 %v876, %v874
        %v905 = vpack.c.bf16 %v879, %v877
        %v906 = vpack.c.bf16 %v880, %v878
        %v907 = vpack.c.bf16 %v883, %v881
        %v908 = vpack.c.bf16 %v884, %v882
        %v909 = vpack.c.bf16 %v887, %v885
        %v910 = vpack.c.bf16 %v888, %v886
        %v911 = vpack.c.bf16 %v891, %v889
        %v912 = vpack.c.bf16 %v892, %v890
        %v913 = vpack.c.bf16 %v895, %v893
        %v914 = vpack.c.bf16 %v896, %v894
        %v915 = vpack.c.bf16 %v899, %v897
        %v916 = vpack.c.bf16 %v900, %v898
        %v919 = vrot.slane %v499, 2
        %v920 = vrot.slane %v500, 2
        %923 = vmatprep.subr.bf16.mxu0 %v902
        %924 = vmatpush1.bf16.xpose.msra.mxu0 %v901
        %925 = vmatprep.subr.bf16.mxu0 %v904
        %926 = vmatpush1.bf16.xpose.msra.mxu0 %v903
        %927 = vmatprep.subr.bf16.mxu0 %v906
        %928 = vmatpush1.bf16.xpose.msra.mxu0 %v905
        %929 = vmatprep.subr.bf16.mxu0 %v908
        %930 = vmatpush1.bf16.xpose.msra.mxu0 %v907
        %931 = vmatprep.subr.bf16.mxu0 %v910
        %932 = vmatpush1.bf16.xpose.msra.mxu0 %v909
        %933 = vmatprep.subr.bf16.mxu0 %v912
        %934 = vmatpush1.bf16.xpose.msra.mxu0 %v911
        %935 = vmatprep.subr.bf16.mxu0 %v914
        %936 = vmatpush1.bf16.xpose.msra.mxu0 %v913
        %937 = vmatprep.subr.bf16.mxu0 %v916
        %938 = vmatpush1.bf16.xpose.msra.mxu0 %v915
        %939 = vmatprep.subr.bf16.mxu0 0
        %940 = vmatpush1.bf16.xpose.msra.mxu0 0
        %941 = vmatprep.subr.bf16.mxu0 0
        %942 = vmatpush1.bf16.xpose.msra.mxu0 0
        %943 = vmatprep.subr.bf16.mxu0 0
        %944 = vmatpush1.bf16.xpose.msra.mxu0 0
        %945 = vmatprep.subr.bf16.mxu0 0
        %946 = vmatpush1.bf16.xpose.msra.mxu0 0
        %947 = vmatprep.subr.bf16.mxu0 0
        %948 = vmatpush1.bf16.xpose.msra.mxu0 0
        %949 = vmatprep.subr.bf16.mxu0 0
        %950 = vmatpush1.bf16.xpose.msra.mxu0 0
        %951 = vmatprep.subr.bf16.mxu0 0
        %952 = vmatpush1.bf16.xpose.msra.mxu0 0
        %953 = vmatprep.subr.bf16.mxu0 0
        %954 = vmatpush1.bf16.xpose.msra.mxu0 0
        %955 = vmatprep.mubr.bf16.mxu0 %v920
        %956 = vmatmul.mubr.bf16.gmra.mrb[0].mxu0 %v919
        %v957 = vpop.f32.mrb[0].mxu0
        %v958 = vadd.f32 0.0, %v957
        %v959 = vpop.f32.mrb[0].mxu0
        %v960 = vpop.f32.mrb[0].mxu0
        %v961 = vpop.f32.mrb[0].mxu0
        %962 = vdwg.mxu0
        %s963 = sld [smem:[#allocation2]]
        %v964 = vstv %s963
        %v965 = vmul.f32 %v964, %v958
        %v966 = vadd.f32 %v325, %v965
        %967 = vst [vmem:[%s309] sm:$0xf] %v966
        %s968 = sand.u32 %s203, 1
        %s969 = scalar_lea.sflag [#allocation4], %s968
        %s970 = sand.u32 %s203, 1
        %s971 = smul.addr %s970, 4
        %s972 = scalar_lea.vmem [#allocation3], %s971
        // Predicated region
        $region49: #{tpu_custom_call.1} parent=47 // pred_check
          %p973 = pneg %p213
        $region50: #{tpu_custom_call.1} parent=47 // pred_check_branch
          %975 = sbr.rel (%p973) target = $region52
        $region51: #{tpu_custom_call.1} parent=47 // pred_region
          %s977 = ssub.s32 64, 64
          %978 = vsyncadd %s969, %s977
          %s979 = smul.addr %s26, 2
          %s980 = sadd.s32 %s27, %s979
          %s981 = smul.addr %s980, 64
          %s982 = scalar_lea.hbm %s7, %s981
          %s984 = sshll.u32 %s972, 4
          %s985 = int_to_ptr.vmem [resolvable:$true] %s984
          %987 = dma.vmem_to_hbm [thread:$0]  %s985, 64, %s982, %s969
        $region52: #{tpu_custom_call.1} parent=47 // pred_fallthru
          _
      $region48: #{tpu_custom_call.1} parent=5 // pred_fallthru
        _
      %p988 = scmp.le.s32.totalorder 2, %s17
      // Predicated region
      $region53: #{tpu_custom_call.1} parent=5 // pred_check
        %p989 = pneg %p988
      $region54: #{tpu_custom_call.1} parent=5 // pred_check_branch
        %991 = sbr.rel (%p989) target = $region56
      $region55: #{tpu_custom_call.1} parent=5 // pred_region
        %s992 = ssub.s32 %s17, 2
        // Predicated region
        $region57: #{tpu_custom_call.1} parent=55 // pred_check
          %p993 = pneg %p219
        $region58: #{tpu_custom_call.1} parent=55 // pred_check_branch
          %995 = sbr.rel (%p993) target = $region60
        $region59: #{tpu_custom_call.1} parent=55 // pred_region
          %s996 = sand.u32 %s204, 1
          %s997 = scalar_lea.sflag [#allocation4], %s996
          %s998 = sand.u32 %s204, 1
          %s999 = smul.addr %s998, 4
          %s1000 = scalar_lea.vmem [#allocation3], %s999
          %1001 = dma.done %s997, 64
        $region60: #{tpu_custom_call.1} parent=55 // pred_fallthru
          _
      $region56: #{tpu_custom_call.1} parent=5 // pred_fallthru
        _
    $region6: #{tpu_custom_call.1} parent=1 // loop_footer
      %s21 = sadd.s32 1, %s17
    $region7: #{tpu_custom_call.1} parent=1 // loop_footer_branch
      %16 = sbr.rel target = $region3
    $region8: #{tpu_custom_call.1} parent=1 // loop_exit
      _
    %1002 = vsyncpa [#allocation4], 1
    %s1003 = scalar_lea.sflag [#allocation4], 1
    %1004 = vsyncpa %s1003, 1

</llo_original>
